<compile_context>
chip_gen: v5e
topology: v5e:2x2
jax: 0.10.0
libtpu: 0.0.40
codegen_flags: <defaults>
</compile_context>

<pallas_src>
import functools
import math

import jax
import jax.numpy as jnp
from jax.experimental import pallas as pl
from jax.experimental.pallas import tpu as pltpu


def _round_up(x, m):
    return (x + m - 1) // m * m


def _vmem_cap_bytes():
    """Generation-aware scoped-VMEM budget (v7x: 64 MiB phys, v5e/v6e: 128 MiB)."""
    try:
        cap = int(pltpu.get_tpu_info().vmem_capacity_bytes)
    except Exception:
        cap = 64 * 2 ** 20            # conservative fallback (v7x-sized)
    return min(cap // 2, 48 * 2 ** 20)


def _pick_batch_tile(B, block_b, want_split):
    """Return (TB, B_pad). Avoid padding B (padding forces an extra copy of x)."""
    if B % 8 != 0:
        if B <= block_b:
            return B, B                      # full-dim exemption, single tile, no pad
        TB = block_b                         # rare: huge non-multiple-of-8 batch
        return TB, _round_up(B, TB)          # (requires one padded copy of x)
    divs = [d for d in range(8, min(B, block_b) + 1, 8) if B % d == 0]
    TB = max(divs) if divs else B
    if want_split and B >= 16:
        cand = [d for d in divs if d <= B // 2]
        if cand:
            TB = max(cand)                   # >= 2 batch tiles -> both v7x TCs busy
    return TB, B


def _pick_k_tile(F, tk_target):
    """Return (TK, F_pad). Prefer TK | F with TK % 128 == 0 (no padded copy of x)."""
    tk_target = max(128, tk_target)
    if F <= tk_target:
        # Single K step; relies on the full-dim exemption if F % 128 != 0.
        return F, F
    if F % 128 == 0:
        q = F // 128
        for d in range(tk_target // 128, 0, -1):
            if q % d == 0:
                return d * 128, F
    # Fallback (F > tk_target and F not lane-friendly): pad F -> one copy of x.
    tk = tk_target
    return tk, _round_up(F, tk)


# ----------------------------------------------------------------------------
# Pallas kernel: tiled (x @ W) accumulation -> bias -> temperature scaling
# ----------------------------------------------------------------------------
def _verix_temp_kernel(temp_ref, x_ref, w_ref, b_ref, expl_ref, out_ref, *scratch,
                       scaling_method, num_k, tk, w_resident, matmul_dtype):
    # temp_ref: (1,)              SMEM scalar temperature (nn.Parameter(torch.ones(1)))
    # x_ref:    (TB, TK)          f32 input tile (cast to bf16 here, not in wrapper)
    # w_ref:    (F_pad, C_pad) if w_resident else (TK, C_pad)   bf16 weights
    # b_ref:    (1, C_pad)        f32 classifier bias
    # expl_ref: (TB, 1)           per-example explanation sizes (f32)
    # out_ref:  (TB, C_pad)       scaled logits; doubles as f32 accumulator if no scratch
    # scratch:  optional f32 accumulator (only when out dtype != f32)
    k = pl.program_id(1)
    acc_ref = scratch[0] if scratch else out_ref

    @pl.when(k == 0)
    def _():
        acc_ref[...] = jnp.zeros_like(acc_ref)

    if w_resident:
        start = k * tk
        if tk % 128 == 0:
            start = pl.multiple_of(start, 128)
        w_tile = w_ref[pl.ds(start, tk), :]
    else:
        w_tile = w_ref[...]

    acc_ref[...] += jnp.dot(x_ref[...].astype(matmul_dtype), w_tile,
                            preferred_element_type=jnp.float32)

    @pl.when(k == num_k - 1)
    def _():
        logits = acc_ref[...] + b_ref[...]          # (TB, C_pad) f32
        temperature = temp_ref[0]                   # scalar from SMEM
        e = expl_ref[...]                           # (TB, 1) f32

        if scaling_method == "original":
            denom = e + 1.0
        elif scaling_method == "inverse":
            denom = 1.0 / e + 1.0                   # e == 0 -> inf -> out 0 (matches ref)
        elif scaling_method == "square":
            denom = e * e + 1.0
        elif scaling_method == "square-outside":
            denom = (e + 1.0) * (e + 1.0)
        else:
            raise Exception("invalid scaling method")

        # One combined per-row scale (TB divides) then a single broadcast
        # multiply over (TB, C_pad). ~1 ulp from the reference's two divides.
        inv_scale = 1.0 / (temperature * denom)     # (TB, 1)
        out_ref[...] = (logits * inv_scale).astype(out_ref.dtype)


# ----------------------------------------------------------------------------
# Wrapper (flatten NCHW, tile, call pallas_call, slice result)
# ----------------------------------------------------------------------------
def verix_temperature_forward(x_nchw, w, b, temperature, explanation_sizes,
                              scaling_method="original",
                              matmul_dtype=jnp.bfloat16,
                              out_dtype=jnp.float32,
                              block_b=256, block_k=4096):
    """Forward pass of ModelWithVeriXTemperature with a linear inner model.

    x_nchw:             (B, C, H, W)  float32
    w:                  (F, NUM_CLASSES) with F = C*H*W
    b:                  (NUM_CLASSES,)
    temperature:        scalar (shape () or (1,))
    explanation_sizes:  (B,)
    """
    if scaling_method not in ("original", "inverse", "square", "square-outside"):
        raise Exception("invalid scaling method")

    B = x_nchw.shape[0]
    F = math.prod(x_nchw.shape[1:])      # static python int, no device sync
    C = w.shape[1]
    C_pad = _round_up(C, 128)            # lane-dense output stores
    item_mm = jnp.dtype(matmul_dtype).itemsize
    x_item = jnp.dtype(x_nchw.dtype).itemsize
    out_item = jnp.dtype(out_dtype).itemsize

    cap = _vmem_cap_bytes()

    # ---- batch tiling (no x padding; split across TCs when W residency is cheap)
    w_cheap = (2 * _round_up(F, 128) * C_pad * item_mm) <= cap // 2 or F <= block_k
    TB, B_pad = _pick_batch_tile(B, block_b, want_split=w_cheap)
    num_b = B_pad // TB

    # ---- K tiling (prefer TK | F so x needs no padded copy), bounded by VMEM --
    tk_target = block_k
    while True:
        TK, F_pad = _pick_k_tile(F, tk_target)
        x_tile_b = 2 * TB * TK * x_item                     # x double-buffered, original dtype
        w_stream_b = 2 * TK * C_pad * item_mm
        fixed_b = (2 * TB * C_pad * out_item + TB * C_pad * 4     # out bufs + maybe-acc
                   + 2 * TB * 128 * 4 + 2 * 8 * 128 * 4)          # expl + bias
        if x_tile_b + w_stream_b + fixed_b <= cap or tk_target <= 512:
            break
        tk_target //= 2
    num_k = F_pad // TK

    # ---- W residency (count 2x in case Mosaic double-buffers the constant block)
    w_res_b = 2 * F_pad * C_pad * item_mm
    w_resident = (num_k > 1) and (x_tile_b + w_res_b + fixed_b <= int(cap * 0.9))

    est = x_tile_b + (w_res_b if w_resident else w_stream_b) + fixed_b
    vmem_limit = int(min(max(int(est * 1.25), 8 * 2 ** 20), cap))

    # ---- operand prep (no cast / no pad of x in the common case) --------------
    x2d = x_nchw.reshape(B, F)                       # contiguous NCHW -> free reshape, stays f32
    if (B_pad, F_pad) != (B, F):
        # Rare path (B huge & not multiple of 8, or F with no lane-friendly
        # divisor): materializes one padded copy of x.
        x2d = jnp.pad(x2d, ((0, B_pad - B), (0, F_pad - F)))
    w2d = w.astype(matmul_dtype)                     # parameter: one-time cheap cast
    if (F_pad, C_pad) != (F, C):
        w2d = jnp.pad(w2d, ((0, F_pad - F), (0, C_pad - C)))
    b2d = jnp.pad(b.astype(jnp.float32).reshape(1, C), ((0, 0), (0, C_pad - C)))
    temp1 = jnp.asarray(temperature, jnp.float32).reshape(1)
    expl2d = explanation_sizes.astype(jnp.float32).reshape(B, 1)
    if B_pad != B:
        # Pad with 1.0 so the 'inverse' method stays finite on padded rows.
        expl2d = jnp.pad(expl2d, ((0, B_pad - B), (0, 0)), constant_values=1.0)

    if w_resident:
        w_spec = pl.BlockSpec((F_pad, C_pad), lambda i, k: (0, 0))   # fetched once
    else:
        w_spec = pl.BlockSpec((TK, C_pad), lambda i, k: (k, 0))

    use_acc = jnp.dtype(out_dtype) != jnp.dtype(jnp.float32)
    scratch_shapes = [pltpu.VMEM((TB, C_pad), jnp.float32)] if use_acc else []

    kernel = functools.partial(_verix_temp_kernel,
                               scaling_method=scaling_method, num_k=num_k,
                               tk=TK, w_resident=w_resident,
                               matmul_dtype=matmul_dtype)

    out = pl.pallas_call(
        kernel,
        out_shape=jax.ShapeDtypeStruct((B_pad, C_pad), out_dtype),
        grid=(num_b, num_k),
        in_specs=[
            pl.BlockSpec(memory_space=pltpu.MemorySpace.SMEM),   # temperature scalar
            pl.BlockSpec((TB, TK), lambda i, k: (i, k)),         # x tile (f32 in HBM)
            w_spec,                                              # W (resident or streamed)
            pl.BlockSpec((1, C_pad), lambda i, k: (0, 0)),       # bias (constant)
            pl.BlockSpec((TB, 1), lambda i, k: (i, 0)),          # explanation sizes
        ],
        out_specs=pl.BlockSpec((TB, C_pad), lambda i, k: (i, 0)),  # resident over K
        scratch_shapes=scratch_shapes,
        compiler_params=pltpu.CompilerParams(
            dimension_semantics=("parallel", "arbitrary"),
            vmem_limit_bytes=vmem_limit),
    )(temp1, x2d, w2d, b2d, expl2d)

    return out[:B, :C]


# ----------------------------------------------------------------------------
# Pure-JAX reference for sanity checking
# ----------------------------------------------------------------------------
def _reference(x_nchw, w, b, temperature, explanation_sizes, scaling_method,
               matmul_dtype=jnp.float32):
    B = x_nchw.shape[0]
    logits = jnp.dot(x_nchw.reshape(B, -1).astype(matmul_dtype),
                     w.astype(matmul_dtype),
                     preferred_element_type=jnp.float32) + b.astype(jnp.float32)
    t = jnp.asarray(temperature, jnp.float32).reshape(())
    e = explanation_sizes.astype(jnp.float32).reshape(B, 1)
    if scaling_method == "original":
        return logits / t / (e + 1.0)
    if scaling_method == "inverse":
        return logits / t / (1.0 / e + 1.0)
    if scaling_method == "square":
        return logits / t / (e ** 2 + 1.0)
    if scaling_method == "square-outside":
        return logits / t / (e + 1.0) ** 2
    raise Exception("invalid scaling method")


if __name__ == "__main__":
    key = jax.random.PRNGKey(0)
    k_x, k_w, k_b, k_e = jax.random.split(key, 4)

    # Small shapes consistent with a classification model on NCHW images.
    B, C_IN, H, W = 2, 4, 16, 16
    NUM_CLASSES = 10
    F = C_IN * H * W

    x = jax.random.normal(k_x, (B, C_IN, H, W), dtype=jnp.float32)
    # Deterministic synthetic inner-model params (linear classifier).
    w = (jax.random.normal(k_w, (F, NUM_CLASSES), dtype=jnp.float32)
         * (1.0 / math.sqrt(F)))
    b = jax.random.normal(k_b, (NUM_CLASSES,), dtype=jnp.float32) * 0.01
    # temperature = nn.Parameter(torch.ones(1))
    temperature = jnp.ones((1,), dtype=jnp.float32)
    # explanation sizes: positive per-example values (>=1, so 'inverse' is safe)
    explanation_sizes = jax.random.randint(k_e, (B,), 1, 8).astype(jnp.float32)

    for method in ("original", "inverse", "square", "square-outside"):
        out = jax.block_until_ready(verix_temperature_forward(
            x, w, b, temperature, explanation_sizes, scaling_method=method,
            matmul_dtype=jnp.bfloat16))
        ref = _reference(x, w, b, temperature, explanation_sizes, method,
                         matmul_dtype=jnp.bfloat16)
        assert out.shape == (B, NUM_CLASSES)
        assert jnp.allclose(out, ref, atol=2e-3, rtol=2e-3), \
            f"mismatch vs reference ({method})"

    # Larger batch exercising the multi-batch-tile / resident-W / K-accumulation
    # path (num_b=2, num_k=4 with block_k=256).
    B2 = 32
    k_x2, k_e2 = jax.random.split(k_x)
    x2 = jax.random.normal(k_x2, (B2, C_IN, H, W), dtype=jnp.float32)
    e2 = jax.random.randint(k_e2, (B2,), 1, 8).astype(jnp.float32)
    out2 = jax.block_until_ready(verix_temperature_forward(
        x2, w, b, temperature, e2, scaling_method="original",
        matmul_dtype=jnp.bfloat16, block_k=256))
    ref2 = _reference(x2, w, b, temperature, e2, "original",
                      matmul_dtype=jnp.bfloat16)
    assert out2.shape == (B2, NUM_CLASSES)
    assert jnp.allclose(out2, ref2, atol=2e-3, rtol=2e-3), "mismatch (batched)"

    # TODO(synk): set_temperature()'s LBFGS calibration loop and the ECE/NLL
    # evaluation in test() are host-side training/eval logic, not part of the
    # forward pass, so they are not kernelized.
    print("KERNEL_OK")
</pallas_src>

<mosaic_0001>
module attributes {stable_mosaic.version = 11 : i64} {
  func.func @_verix_temp_kernel(%arg0: i32, %arg1: i32, %arg2: memref<1xf32, #tpu.memory_space<smem>>, %arg3: memref<2x1024xf32, #tpu.memory_space<vmem>>, %arg4: memref<1024x128xbf16, #tpu.memory_space<vmem>>, %arg5: memref<1x128xf32, #tpu.memory_space<vmem>>, %arg6: memref<2x1xf32, #tpu.memory_space<vmem>>, %arg7: memref<2x128xf32, #tpu.memory_space<vmem>>) attributes {dimension_semantics = [#tpu.dimension_semantics<parallel>, #tpu.dimension_semantics<arbitrary>], iteration_bounds = array<i64: 1, 1>, scalar_prefetch = 0 : i64, scratch_operands = 0 : i64, tpu.core_type = #tpu.core_type<tc>, window_params = [{transform_indices = @transform_0, window_bounds = array<i64: 1>}, {transform_indices = @transform_1, window_bounds = array<i64: 2, 1024>}, {transform_indices = @transform_2, window_bounds = array<i64: 1024, 128>}, {pipeline_mode = #tpu.pipeline_mode<synchronous>, transform_indices = @transform_3, window_bounds = array<i64: 1, 128>}, {transform_indices = @transform_4, window_bounds = array<i64: 2, 1>}, {transform_indices = @transform_5, window_bounds = array<i64: 2, 128>}]} {
    %c0_i32 = arith.constant 0 : i32
    %0 = arith.cmpi eq, %arg1, %c0_i32 : i32
    %1 = arith.extui %0 : i1 to i32
    %c0_i32_0 = arith.constant 0 : i32
    %2 = arith.cmpi ne, %1, %c0_i32_0 : i32
    scf.if %2 {
      %cst_10 = arith.constant 0.000000e+00 : f32
      %13 = vector.broadcast %cst_10 : f32 to vector<2x128xf32>
      %c0_11 = arith.constant 0 : index
      %c0_12 = arith.constant 0 : index
      %14 = vector.load %arg7[%c0_11, %c0_12] : memref<2x128xf32, #tpu.memory_space<vmem>>, vector<2x128xf32>
      tpu.vector_store %arg7[%c0_11, %c0_12], %13 {strides = array<i32>} : memref<2x128xf32, #tpu.memory_space<vmem>>, vector<2x128xf32>,
    } else {
    }
    %c0 = arith.constant 0 : index
    %c0_1 = arith.constant 0 : index
    %3 = vector.load %arg4[%c0, %c0_1] : memref<1024x128xbf16, #tpu.memory_space<vmem>>, vector<1024x128xbf16>
    %c0_2 = arith.constant 0 : index
    %c0_3 = arith.constant 0 : index
    %4 = vector.load %arg7[%c0_2, %c0_3] : memref<2x128xf32, #tpu.memory_space<vmem>>, vector<2x128xf32>
    %c0_4 = arith.constant 0 : index
    %c0_5 = arith.constant 0 : index
    %5 = vector.load %arg3[%c0_4, %c0_5] : memref<2x1024xf32, #tpu.memory_space<vmem>>, vector<2x1024xf32>
    %6 = arith.truncf %5 : vector<2x1024xf32> to vector<2x1024xbf16>
    %cst = arith.constant dense<0.000000e+00> : vector<2x128xf32>
    %7 = tpu.matmul %6, %3, %cst {dimension_numbers = #tpu.dot_dimension_numbers<[1], [0], [0], [1], [0, 0, 1, 1], [], []>} : vector<2x1024xbf16>, vector<1024x128xbf16>, vector<2x128xf32> -> vector<2x128xf32>
    %8 = arith.addf %4, %7 : vector<2x128xf32>
    %c0_6 = arith.constant 0 : index
    %c0_7 = arith.constant 0 : index
    %9 = vector.load %arg7[%c0_6, %c0_7] : memref<2x128xf32, #tpu.memory_space<vmem>>, vector<2x128xf32>
    tpu.vector_store %arg7[%c0_6, %c0_7], %8 {strides = array<i32>} : memref<2x128xf32, #tpu.memory_space<vmem>>, vector<2x128xf32>,
    %c0_i32_8 = arith.constant 0 : i32
    %10 = arith.cmpi eq, %arg1, %c0_i32_8 : i32
    %11 = arith.extui %10 : i1 to i32
    %c0_i32_9 = arith.constant 0 : i32
    %12 = arith.cmpi ne, %11, %c0_i32_9 : i32
    scf.if %12 {
      %c0_10 = arith.constant 0 : index
      %c0_11 = arith.constant 0 : index
      %13 = vector.load %arg7[%c0_10, %c0_11] : memref<2x128xf32, #tpu.memory_space<vmem>>, vector<2x128xf32>
      %c0_12 = arith.constant 0 : index
      %c0_13 = arith.constant 0 : index
      %14 = vector.load %arg5[%c0_12, %c0_13] : memref<1x128xf32, #tpu.memory_space<vmem>>, vector<1x128xf32>
      %15 = vector.broadcast %14 : vector<1x128xf32> to vector<2x128xf32>
      %16 = arith.addf %13, %15 : vector<2x128xf32>
      %c0_14 = arith.constant 0 : index
      %17 = memref.load %arg2[%c0_14] : memref<1xf32, #tpu.memory_space<smem>>
      %c0_15 = arith.constant 0 : index
      %c0_16 = arith.constant 0 : index
      %18 = vector.load %arg6[%c0_15, %c0_16] : memref<2x1xf32, #tpu.memory_space<vmem>>, vector<2x1xf32>
      %cst_17 = arith.constant 1.000000e+00 : f32
      %19 = vector.broadcast %cst_17 : f32 to vector<2x1xf32>
      %20 = arith.addf %18, %19 : vector<2x1xf32>
      %21 = vector.broadcast %17 : f32 to vector<2x1xf32>
      %22 = arith.mulf %21, %20 : vector<2x1xf32>
      %cst_18 = arith.constant 1.000000e+00 : f32
      %23 = vector.broadcast %cst_18 : f32 to vector<2x1xf32>
      %24 = arith.divf %23, %22 : vector<2x1xf32>
      %25 = vector.broadcast %24 : vector<2x1xf32> to vector<2x128xf32>
      %26 = arith.mulf %16, %25 : vector<2x128xf32>
      %c0_19 = arith.constant 0 : index
      %c0_20 = arith.constant 0 : index
      %27 = vector.load %arg7[%c0_19, %c0_20] : memref<2x128xf32, #tpu.memory_space<vmem>>, vector<2x128xf32>
      tpu.vector_store %arg7[%c0_19, %c0_20], %26 {strides = array<i32>} : memref<2x128xf32, #tpu.memory_space<vmem>>, vector<2x128xf32>,
    } else {
    }
    return
  }
  func.func @transform_0(%arg0: i32, %arg1: i32) -> i32 {
    %c0_i32 = arith.constant 0 : i32
    %c0_i32_0 = arith.constant 0 : i32
    return %c0_i32 : i32
  }
  func.func @transform_1(%arg0: i32, %arg1: i32) -> (i32, i32) {
    %c0_i32 = arith.constant 0 : i32
    return %arg0, %arg1 : i32, i32
  }
  func.func @transform_2(%arg0: i32, %arg1: i32) -> (i32, i32) {
    %c0_i32 = arith.constant 0 : i32
    %c0_i32_0 = arith.constant 0 : i32
    return %arg1, %c0_i32 : i32, i32
  }
  func.func @transform_3(%arg0: i32, %arg1: i32) -> (i32, i32) {
    %c0_i32 = arith.constant 0 : i32
    %c0_i32_0 = arith.constant 0 : i32
    %c0_i32_1 = arith.constant 0 : i32
    return %c0_i32, %c0_i32_0 : i32, i32
  }
  func.func @transform_4(%arg0: i32, %arg1: i32) -> (i32, i32) {
    %c0_i32 = arith.constant 0 : i32
    %c0_i32_0 = arith.constant 0 : i32
    return %arg0, %c0_i32 : i32, i32
  }
  func.func @transform_5(%arg0: i32, %arg1: i32) -> (i32, i32) {
    %c0_i32 = arith.constant 0 : i32
    %c0_i32_0 = arith.constant 0 : i32
    return %arg0, %c0_i32 : i32, i32
  }
}

</mosaic_0001>

<llo_original>
// kernel: tpu_custom_call.1
$region0: #{tpu_custom_call.1}
  #allocation0 [shape = 'u32[]', space=smem, size = 0x4, offset = 0x4, fixed_abs, tag = 'smem constant byte address 0x4 - core index']
  #allocation1 [shape = 'u32[72,128]{1,0:T(1,128)}', space=vmem, size = 0x9000, scoped, tag = 'internal scratch']
  #allocation2 [shape = 'f32[1]{0:T(128)S(6)}', space=smem, size = 0x200, scoped, tag = 'scoped memory for tpu_custom_call.1']
  %s0 = inlined_call_operand.<no memory space> [shape: f32[1], index: 0, kind: input, shape index: {}]
  %s1 = inlined_call_operand.hbm [shape: f32[2,1024], index: 1, kind: input, shape index: {}]
  %s2 = inlined_call_operand.hbm [shape: bf16[1024,128], index: 2, kind: input, shape index: {}]
  %s3 = inlined_call_operand.vmem [shape: f32[1,128], index: 3, kind: input, shape index: {}]
  %s4 = inlined_call_operand.vmem [shape: f32[2,1], index: 4, kind: input, shape index: {}]
  %s5 = inlined_call_operand.hbm [shape: f32[2,128], index: 5, kind: output, shape index: {}]
  %s6 = sld [smem:[#allocation0]]
  $region46: #{tpu_custom_call.1} parent=0
    _
  %s8 = ssub.s32 1, %s6
  %s9 = scalar_select 0, %s8, %s6
  %10 = sst [smem:[#allocation2]] %s0
  $region1: #{tpu_custom_call.1} parent=0
    #allocation3 [shape = 'u8[8192]{0}', space=vmem, size = 0x2000, scoped, tag = 'input window, operand 1, single buffered']
    #allocation4 [shape = 's32[1]{0}', space=sflag, size = 0x4, scoped, tag = 'scoped memory for tpu_custom_call.1']
    #allocation5 [shape = 's32[1]{0}', space=sflag, size = 0x4, scoped, tag = 'scoped memory for tpu_custom_call.1']
    #allocation6 [shape = 'u8[262144]{0}', space=vmem, size = 0x40000, scoped, tag = 'input window, operand 2, single buffered']
    #allocation7 [shape = 's32[1]{0}', space=sflag, size = 0x4, scoped, tag = 'scoped memory for tpu_custom_call.1']
    #allocation8 [shape = 'u8[1024]{0}', space=vmem, size = 0x400, scoped, tag = 'output window, operand 0, single buffered']
    %11 = vsyncpa [#allocation4], 0
    %12 = vsyncpa [#allocation7], 0
    %13 = vsyncpa [#allocation5], 0
    // Predicated region
    $region2: #{tpu_custom_call.1} parent=1 // pred_check
      _
    $region3: #{tpu_custom_call.1} parent=1 // pred_check_branch
      %15 = sbr.rel (0) target = $region5
    $region4: #{tpu_custom_call.1} parent=1 // pred_region
      _
    $region5: #{tpu_custom_call.1} parent=1 // pred_fallthru
      _
    // Predicated region
    $region6: #{tpu_custom_call.1} parent=1 // pred_check
      _
    $region7: #{tpu_custom_call.1} parent=1 // pred_check_branch
      %17 = sbr.rel (0) target = $region9
    $region8: #{tpu_custom_call.1} parent=1 // pred_region
      %19 = vsyncadd [#allocation4], 0
      %s21 = sshll.u32 %s1, 4
      %s22 = int_to_ptr.hbm [resolvable:$true] %s21
      %s23 = sshll.u32 [#allocation3], 4
      %s24 = int_to_ptr.vmem [resolvable:$true] %s23
      %26 = dma.hbm_to_vmem [thread:$0]  %s22, 256, %s24, [#allocation4]
    $region9: #{tpu_custom_call.1} parent=1 // pred_fallthru
      _
    // Predicated region
    $region10: #{tpu_custom_call.1} parent=1 // pred_check
      _
    $region11: #{tpu_custom_call.1} parent=1 // pred_check_branch
      %28 = sbr.rel (0) target = $region13
    $region12: #{tpu_custom_call.1} parent=1 // pred_region
      %30 = vsyncadd [#allocation7], 0
      %s31 = sshll.u32 %s2, 4
      %s32 = int_to_ptr.hbm [resolvable:$true] %s31
      %s33 = sshll.u32 [#allocation6], 4
      %s34 = int_to_ptr.vmem [resolvable:$true] %s33
      %39 = dma.hbm_to_vmem [thread:$0]  %s32, 8192, %s34, [#allocation7], 64, 64, 4
    $region13: #{tpu_custom_call.1} parent=1 // pred_fallthru
      _
    // Predicated region
    $region14: #{tpu_custom_call.1} parent=1 // pred_check
      _
    $region15: #{tpu_custom_call.1} parent=1 // pred_check_branch
      %41 = sbr.rel (0) target = $region17
    $region16: #{tpu_custom_call.1} parent=1 // pred_region
      _
    $region17: #{tpu_custom_call.1} parent=1 // pred_fallthru
      _
    // Predicated region
    $region18: #{tpu_custom_call.1} parent=1 // pred_check
      _
    $region19: #{tpu_custom_call.1} parent=1 // pred_check_branch
      %43 = sbr.rel (0) target = $region21
    $region20: #{tpu_custom_call.1} parent=1 // pred_region
      _
    $region21: #{tpu_custom_call.1} parent=1 // pred_fallthru
      _
    // Predicated region
    $region22: #{tpu_custom_call.1} parent=1 // pred_check
      _
    $region23: #{tpu_custom_call.1} parent=1 // pred_check_branch
      %45 = sbr.rel (0) target = $region25
    $region24: #{tpu_custom_call.1} parent=1 // pred_region
      %47 = dma.done [#allocation4], 256
    $region25: #{tpu_custom_call.1} parent=1 // pred_fallthru
      _
    // Predicated region
    $region26: #{tpu_custom_call.1} parent=1 // pred_check
      _
    $region27: #{tpu_custom_call.1} parent=1 // pred_check_branch
      %49 = sbr.rel (0) target = $region29
    $region28: #{tpu_custom_call.1} parent=1 // pred_region
      %51 = dma.done [#allocation7], 8192
    $region29: #{tpu_custom_call.1} parent=1 // pred_fallthru
      _
    %p52 = scmp.eq.s32.totalorder 0, 0
    // Predicated region
    $region30: #{tpu_custom_call.1} parent=1 // pred_check
      %p53 = pneg %p52
    $region31: #{tpu_custom_call.1} parent=1 // pred_check_branch
      %55 = sbr.rel (%p53) target = $region33
    $region32: #{tpu_custom_call.1} parent=1 // pred_region
      %56 = vst [vmem:[#allocation8] sm:$0x3] 0.0
    $region33: #{tpu_custom_call.1} parent=1 // pred_fallthru
      _
    %v57 = vld [vmem:[#allocation6] sm:$0xf]
    %v58 = vld [vmem:[#allocation6 + $0x4] sm:$0xf]
    %v59 = vld [vmem:[#allocation6 + $0x8] sm:$0xf]
    %v60 = vld [vmem:[#allocation6 + $0xc] sm:$0xf]
    %v61 = vld [vmem:[#allocation6 + $0x10] sm:$0xf]
    %v62 = vld [vmem:[#allocation6 + $0x14] sm:$0xf]
    %v63 = vld [vmem:[#allocation6 + $0x18] sm:$0xf]
    %v64 = vld [vmem:[#allocation6 + $0x1c] sm:$0xf]
    %v65 = vld [vmem:[#allocation6 + $0x20] sm:$0xf]
    %v66 = vld [vmem:[#allocation6 + $0x24] sm:$0xf]
    %v67 = vld [vmem:[#allocation6 + $0x28] sm:$0xf]
    %v68 = vld [vmem:[#allocation6 + $0x2c] sm:$0xf]
    %v69 = vld [vmem:[#allocation6 + $0x30] sm:$0xf]
    %v70 = vld [vmem:[#allocation6 + $0x34] sm:$0xf]
    %v71 = vld [vmem:[#allocation6 + $0x38] sm:$0xf]
    %v72 = vld [vmem:[#allocation6 + $0x3c] sm:$0xf]
    %v73 = vld [vmem:[#allocation6 + $0x40] sm:$0xf]
    %v74 = vld [vmem:[#allocation6 + $0x44] sm:$0xf]
    %v75 = vld [vmem:[#allocation6 + $0x48] sm:$0xf]
    %v76 = vld [vmem:[#allocation6 + $0x4c] sm:$0xf]
    %v77 = vld [vmem:[#allocation6 + $0x50] sm:$0xf]
    %v78 = vld [vmem:[#allocation6 + $0x54] sm:$0xf]
    %v79 = vld [vmem:[#allocation6 + $0x58] sm:$0xf]
    %v80 = vld [vmem:[#allocation6 + $0x5c] sm:$0xf]
    %v81 = vld [vmem:[#allocation6 + $0x60] sm:$0xf]
    %v82 = vld [vmem:[#allocation6 + $0x64] sm:$0xf]
    %v83 = vld [vmem:[#allocation6 + $0x68] sm:$0xf]
    %v84 = vld [vmem:[#allocation6 + $0x6c] sm:$0xf]
    %v85 = vld [vmem:[#allocation6 + $0x70] sm:$0xf]
    %v86 = vld [vmem:[#allocation6 + $0x74] sm:$0xf]
    %v87 = vld [vmem:[#allocation6 + $0x78] sm:$0xf]
    %v88 = vld [vmem:[#allocation6 + $0x7c] sm:$0xf]
    %v89 = vld [vmem:[#allocation6 + $0x80] sm:$0xf]
    %v90 = vld [vmem:[#allocation6 + $0x84] sm:$0xf]
    %v91 = vld [vmem:[#allocation6 + $0x88] sm:$0xf]
    %v92 = vld [vmem:[#allocation6 + $0x8c] sm:$0xf]
    %v93 = vld [vmem:[#allocation6 + $0x90] sm:$0xf]
    %v94 = vld [vmem:[#allocation6 + $0x94] sm:$0xf]
    %v95 = vld [vmem:[#allocation6 + $0x98] sm:$0xf]
    %v96 = vld [vmem:[#allocation6 + $0x9c] sm:$0xf]
    %v97 = vld [vmem:[#allocation6 + $0xa0] sm:$0xf]
    %v98 = vld [vmem:[#allocation6 + $0xa4] sm:$0xf]
    %v99 = vld [vmem:[#allocation6 + $0xa8] sm:$0xf]
    %v100 = vld [vmem:[#allocation6 + $0xac] sm:$0xf]
    %v101 = vld [vmem:[#allocation6 + $0xb0] sm:$0xf]
    %v102 = vld [vmem:[#allocation6 + $0xb4] sm:$0xf]
    %v103 = vld [vmem:[#allocation6 + $0xb8] sm:$0xf]
    %v104 = vld [vmem:[#allocation6 + $0xbc] sm:$0xf]
    %v105 = vld [vmem:[#allocation6 + $0xc0] sm:$0xf]
    %v106 = vld [vmem:[#allocation6 + $0xc4] sm:$0xf]
    %v107 = vld [vmem:[#allocation6 + $0xc8] sm:$0xf]
    %v108 = vld [vmem:[#allocation6 + $0xcc] sm:$0xf]
    %v109 = vld [vmem:[#allocation6 + $0xd0] sm:$0xf]
    %v110 = vld [vmem:[#allocation6 + $0xd4] sm:$0xf]
    %v111 = vld [vmem:[#allocation6 + $0xd8] sm:$0xf]
    %v112 = vld [vmem:[#allocation6 + $0xdc] sm:$0xf]
    %v113 = vld [vmem:[#allocation6 + $0xe0] sm:$0xf]
    %v114 = vld [vmem:[#allocation6 + $0xe4] sm:$0xf]
    %v115 = vld [vmem:[#allocation6 + $0xe8] sm:$0xf]
    %v116 = vld [vmem:[#allocation6 + $0xec] sm:$0xf]
    %v117 = vld [vmem:[#allocation6 + $0xf0] sm:$0xf]
    %v118 = vld [vmem:[#allocation6 + $0xf4] sm:$0xf]
    %v119 = vld [vmem:[#allocation6 + $0xf8] sm:$0xf]
    %v120 = vld [vmem:[#allocation6 + $0xfc] sm:$0xf]
    %v121 = vld [vmem:[#allocation6 + $0x100] sm:$0xf]
    %v122 = vld [vmem:[#allocation6 + $0x104] sm:$0xf]
    %v123 = vld [vmem:[#allocation6 + $0x108] sm:$0xf]
    %v124 = vld [vmem:[#allocation6 + $0x10c] sm:$0xf]
    %v125 = vld [vmem:[#allocation6 + $0x110] sm:$0xf]
    %v126 = vld [vmem:[#allocation6 + $0x114] sm:$0xf]
    %v127 = vld [vmem:[#allocation6 + $0x118] sm:$0xf]
    %v128 = vld [vmem:[#allocation6 + $0x11c] sm:$0xf]
    %v129 = vld [vmem:[#allocation6 + $0x120] sm:$0xf]
    %v130 = vld [vmem:[#allocation6 + $0x124] sm:$0xf]
    %v131 = vld [vmem:[#allocation6 + $0x128] sm:$0xf]
    %v132 = vld [vmem:[#allocation6 + $0x12c] sm:$0xf]
    %v133 = vld [vmem:[#allocation6 + $0x130] sm:$0xf]
    %v134 = vld [vmem:[#allocation6 + $0x134] sm:$0xf]
    %v135 = vld [vmem:[#allocation6 + $0x138] sm:$0xf]
    %v136 = vld [vmem:[#allocation6 + $0x13c] sm:$0xf]
    %v137 = vld [vmem:[#allocation6 + $0x140] sm:$0xf]
    %v138 = vld [vmem:[#allocation6 + $0x144] sm:$0xf]
    %v139 = vld [vmem:[#allocation6 + $0x148] sm:$0xf]
    %v140 = vld [vmem:[#allocation6 + $0x14c] sm:$0xf]
    %v141 = vld [vmem:[#allocation6 + $0x150] sm:$0xf]
    %v142 = vld [vmem:[#allocation6 + $0x154] sm:$0xf]
    %v143 = vld [vmem:[#allocation6 + $0x158] sm:$0xf]
    %v144 = vld [vmem:[#allocation6 + $0x15c] sm:$0xf]
    %v145 = vld [vmem:[#allocation6 + $0x160] sm:$0xf]
    %v146 = vld [vmem:[#allocation6 + $0x164] sm:$0xf]
    %v147 = vld [vmem:[#allocation6 + $0x168] sm:$0xf]
    %v148 = vld [vmem:[#allocation6 + $0x16c] sm:$0xf]
    %v149 = vld [vmem:[#allocation6 + $0x170] sm:$0xf]
    %v150 = vld [vmem:[#allocation6 + $0x174] sm:$0xf]
    %v151 = vld [vmem:[#allocation6 + $0x178] sm:$0xf]
    %v152 = vld [vmem:[#allocation6 + $0x17c] sm:$0xf]
    %v153 = vld [vmem:[#allocation6 + $0x180] sm:$0xf]
    %v154 = vld [vmem:[#allocation6 + $0x184] sm:$0xf]
    %v155 = vld [vmem:[#allocation6 + $0x188] sm:$0xf]
    %v156 = vld [vmem:[#allocation6 + $0x18c] sm:$0xf]
    %v157 = vld [vmem:[#allocation6 + $0x190] sm:$0xf]
    %v158 = vld [vmem:[#allocation6 + $0x194] sm:$0xf]
    %v159 = vld [vmem:[#allocation6 + $0x198] sm:$0xf]
    %v160 = vld [vmem:[#allocation6 + $0x19c] sm:$0xf]
    %v161 = vld [vmem:[#allocation6 + $0x1a0] sm:$0xf]
    %v162 = vld [vmem:[#allocation6 + $0x1a4] sm:$0xf]
    %v163 = vld [vmem:[#allocation6 + $0x1a8] sm:$0xf]
    %v164 = vld [vmem:[#allocation6 + $0x1ac] sm:$0xf]
    %v165 = vld [vmem:[#allocation6 + $0x1b0] sm:$0xf]
    %v166 = vld [vmem:[#allocation6 + $0x1b4] sm:$0xf]
    %v167 = vld [vmem:[#allocation6 + $0x1b8] sm:$0xf]
    %v168 = vld [vmem:[#allocation6 + $0x1bc] sm:$0xf]
    %v169 = vld [vmem:[#allocation6 + $0x1c0] sm:$0xf]
    %v170 = vld [vmem:[#allocation6 + $0x1c4] sm:$0xf]
    %v171 = vld [vmem:[#allocation6 + $0x1c8] sm:$0xf]
    %v172 = vld [vmem:[#allocation6 + $0x1cc] sm:$0xf]
    %v173 = vld [vmem:[#allocation6 + $0x1d0] sm:$0xf]
    %v174 = vld [vmem:[#allocation6 + $0x1d4] sm:$0xf]
    %v175 = vld [vmem:[#allocation6 + $0x1d8] sm:$0xf]
    %v176 = vld [vmem:[#allocation6 + $0x1dc] sm:$0xf]
    %v177 = vld [vmem:[#allocation6 + $0x1e0] sm:$0xf]
    %v178 = vld [vmem:[#allocation6 + $0x1e4] sm:$0xf]
    %v179 = vld [vmem:[#allocation6 + $0x1e8] sm:$0xf]
    %v180 = vld [vmem:[#allocation6 + $0x1ec] sm:$0xf]
    %v181 = vld [vmem:[#allocation6 + $0x1f0] sm:$0xf]
    %v182 = vld [vmem:[#allocation6 + $0x1f4] sm:$0xf]
    %v183 = vld [vmem:[#allocation6 + $0x1f8] sm:$0xf]
    %v184 = vld [vmem:[#allocation6 + $0x1fc] sm:$0xf]
    %v185 = vld [vmem:[#allocation8] sm:$0x3]
    %v186 = vld [vmem:[#allocation3] sm:$0xff]
    %v187 = vld [vmem:[#allocation3 + $0x8] sm:$0xff]
    %190 = vst [vmem:[#allocation1] ss:$4 sm:$0xff] %v186
    %s191 = scalar_lea.vmem [#allocation1], 32
    %192 = vst [vmem:[%s191] ss:$4 sm:$0xff] %v187
    %v193 = vld.sshfl [vmem:[#allocation1] sm:$0xff pattern:$0x73625140]
    %v194 = vld.sshfl [vmem:[#allocation1 + $0x8] sm:$0xff pattern:$0x73625140]
    %v195 = vld.sshfl [vmem:[#allocation1 + $0x10] sm:$0xff pattern:$0x73625140]
    %v196 = vld.sshfl [vmem:[#allocation1 + $0x18] sm:$0xff pattern:$0x73625140]
    %v197 = vld.sshfl [vmem:[#allocation1 + $0x20] sm:$0xff pattern:$0x73625140]
    %v198 = vld.sshfl [vmem:[#allocation1 + $0x28] sm:$0xff pattern:$0x73625140]
    %v199 = vld.sshfl [vmem:[#allocation1 + $0x30] sm:$0xff pattern:$0x73625140]
    %v200 = vld.sshfl [vmem:[#allocation1 + $0x38] sm:$0xff pattern:$0x73625140]
    %v209 = vpack.c.bf16 %v193, %v193
    %v210 = vpack.c.bf16 %v194, %v194
    %v211 = vpack.c.bf16 %v195, %v195
    %v212 = vpack.c.bf16 %v196, %v196
    %v213 = vpack.c.bf16 %v197, %v197
    %v214 = vpack.c.bf16 %v198, %v198
    %v215 = vpack.c.bf16 %v199, %v199
    %v216 = vpack.c.bf16 %v200, %v200
    %v345 = vunpack.c.l.b16 %v57
    %v346 = vunpack.c.l.b16 %v58
    %v347 = vunpack.c.l.b16 %v59
    %v348 = vunpack.c.l.b16 %v60
    %v349 = vunpack.c.l.b16 %v61
    %v350 = vunpack.c.l.b16 %v62
    %v351 = vunpack.c.l.b16 %v63
    %v352 = vunpack.c.l.b16 %v64
    %v353 = vunpack.c.l.b16 %v65
    %v354 = vunpack.c.l.b16 %v66
    %v355 = vunpack.c.l.b16 %v67
    %v356 = vunpack.c.l.b16 %v68
    %v357 = vunpack.c.l.b16 %v69
    %v358 = vunpack.c.l.b16 %v70
    %v359 = vunpack.c.l.b16 %v71
    %v360 = vunpack.c.l.b16 %v72
    %v361 = vunpack.c.l.b16 %v73
    %v362 = vunpack.c.l.b16 %v74
    %v363 = vunpack.c.l.b16 %v75
    %v364 = vunpack.c.l.b16 %v76
    %v365 = vunpack.c.l.b16 %v77
    %v366 = vunpack.c.l.b16 %v78
    %v367 = vunpack.c.l.b16 %v79
    %v368 = vunpack.c.l.b16 %v80
    %v369 = vunpack.c.l.b16 %v81
    %v370 = vunpack.c.l.b16 %v82
    %v371 = vunpack.c.l.b16 %v83
    %v372 = vunpack.c.l.b16 %v84
    %v373 = vunpack.c.l.b16 %v85
    %v374 = vunpack.c.l.b16 %v86
    %v375 = vunpack.c.l.b16 %v87
    %v376 = vunpack.c.l.b16 %v88
    %v377 = vunpack.c.l.b16 %v89
    %v378 = vunpack.c.l.b16 %v90
    %v379 = vunpack.c.l.b16 %v91
    %v380 = vunpack.c.l.b16 %v92
    %v381 = vunpack.c.l.b16 %v93
    %v382 = vunpack.c.l.b16 %v94
    %v383 = vunpack.c.l.b16 %v95
    %v384 = vunpack.c.l.b16 %v96
    %v385 = vunpack.c.l.b16 %v97
    %v386 = vunpack.c.l.b16 %v98
    %v387 = vunpack.c.l.b16 %v99
    %v388 = vunpack.c.l.b16 %v100
    %v389 = vunpack.c.l.b16 %v101
    %v390 = vunpack.c.l.b16 %v102
    %v391 = vunpack.c.l.b16 %v103
    %v392 = vunpack.c.l.b16 %v104
    %v393 = vunpack.c.l.b16 %v105
    %v394 = vunpack.c.l.b16 %v106
    %v395 = vunpack.c.l.b16 %v107
    %v396 = vunpack.c.l.b16 %v108
    %v397 = vunpack.c.l.b16 %v109
    %v398 = vunpack.c.l.b16 %v110
    %v399 = vunpack.c.l.b16 %v111
    %v400 = vunpack.c.l.b16 %v112
    %v401 = vunpack.c.l.b16 %v113
    %v402 = vunpack.c.l.b16 %v114
    %v403 = vunpack.c.l.b16 %v115
    %v404 = vunpack.c.l.b16 %v116
    %v405 = vunpack.c.l.b16 %v117
    %v406 = vunpack.c.l.b16 %v118
    %v407 = vunpack.c.l.b16 %v119
    %v408 = vunpack.c.l.b16 %v120
    %v409 = vunpack.c.l.b16 %v121
    %v410 = vunpack.c.l.b16 %v122
    %v411 = vunpack.c.l.b16 %v123
    %v412 = vunpack.c.l.b16 %v124
    %v413 = vunpack.c.l.b16 %v125
    %v414 = vunpack.c.l.b16 %v126
    %v415 = vunpack.c.l.b16 %v127
    %v416 = vunpack.c.l.b16 %v128
    %v417 = vunpack.c.l.b16 %v129
    %v418 = vunpack.c.l.b16 %v130
    %v419 = vunpack.c.l.b16 %v131
    %v420 = vunpack.c.l.b16 %v132
    %v421 = vunpack.c.l.b16 %v133
    %v422 = vunpack.c.l.b16 %v134
    %v423 = vunpack.c.l.b16 %v135
    %v424 = vunpack.c.l.b16 %v136
    %v425 = vunpack.c.l.b16 %v137
    %v426 = vunpack.c.l.b16 %v138
    %v427 = vunpack.c.l.b16 %v139
    %v428 = vunpack.c.l.b16 %v140
    %v429 = vunpack.c.l.b16 %v141
    %v430 = vunpack.c.l.b16 %v142
    %v431 = vunpack.c.l.b16 %v143
    %v432 = vunpack.c.l.b16 %v144
    %v433 = vunpack.c.l.b16 %v145
    %v434 = vunpack.c.l.b16 %v146
    %v435 = vunpack.c.l.b16 %v147
    %v436 = vunpack.c.l.b16 %v148
    %v437 = vunpack.c.l.b16 %v149
    %v438 = vunpack.c.l.b16 %v150
    %v439 = vunpack.c.l.b16 %v151
    %v440 = vunpack.c.l.b16 %v152
    %v441 = vunpack.c.l.b16 %v153
    %v442 = vunpack.c.l.b16 %v154
    %v443 = vunpack.c.l.b16 %v155
    %v444 = vunpack.c.l.b16 %v156
    %v445 = vunpack.c.l.b16 %v157
    %v446 = vunpack.c.l.b16 %v158
    %v447 = vunpack.c.l.b16 %v159
    %v448 = vunpack.c.l.b16 %v160
    %v449 = vunpack.c.l.b16 %v161
    %v450 = vunpack.c.l.b16 %v162
    %v451 = vunpack.c.l.b16 %v163
    %v452 = vunpack.c.l.b16 %v164
    %v453 = vunpack.c.l.b16 %v165
    %v454 = vunpack.c.l.b16 %v166
    %v455 = vunpack.c.l.b16 %v167
    %v456 = vunpack.c.l.b16 %v168
    %v457 = vunpack.c.l.b16 %v169
    %v458 = vunpack.c.l.b16 %v170
    %v459 = vunpack.c.l.b16 %v171
    %v460 = vunpack.c.l.b16 %v172
    %v461 = vunpack.c.l.b16 %v173
    %v462 = vunpack.c.l.b16 %v174
    %v463 = vunpack.c.l.b16 %v175
    %v464 = vunpack.c.l.b16 %v176
    %v465 = vunpack.c.l.b16 %v177
    %v466 = vunpack.c.l.b16 %v178
    %v467 = vunpack.c.l.b16 %v179
    %v468 = vunpack.c.l.b16 %v180
    %v469 = vunpack.c.l.b16 %v181
    %v470 = vunpack.c.l.b16 %v182
    %v471 = vunpack.c.l.b16 %v183
    %v472 = vunpack.c.l.b16 %v184
    %v473 = vpack.c.b16 %v346, %v345
    %v474 = vpack.c.b16 %v348, %v347
    %v475 = vpack.c.b16 %v350, %v349
    %v476 = vpack.c.b16 %v352, %v351
    %v477 = vpack.c.b16 %v354, %v353
    %v478 = vpack.c.b16 %v356, %v355
    %v479 = vpack.c.b16 %v358, %v357
    %v480 = vpack.c.b16 %v360, %v359
    %v481 = vpack.c.b16 %v362, %v361
    %v482 = vpack.c.b16 %v364, %v363
    %v483 = vpack.c.b16 %v366, %v365
    %v484 = vpack.c.b16 %v368, %v367
    %v485 = vpack.c.b16 %v370, %v369
    %v486 = vpack.c.b16 %v372, %v371
    %v487 = vpack.c.b16 %v374, %v373
    %v488 = vpack.c.b16 %v376, %v375
    %v489 = vpack.c.b16 %v378, %v377
    %v490 = vpack.c.b16 %v380, %v379
    %v491 = vpack.c.b16 %v382, %v381
    %v492 = vpack.c.b16 %v384, %v383
    %v493 = vpack.c.b16 %v386, %v385
    %v494 = vpack.c.b16 %v388, %v387
    %v495 = vpack.c.b16 %v390, %v389
    %v496 = vpack.c.b16 %v392, %v391
    %v497 = vpack.c.b16 %v394, %v393
    %v498 = vpack.c.b16 %v396, %v395
    %v499 = vpack.c.b16 %v398, %v397
    %v500 = vpack.c.b16 %v400, %v399
    %v501 = vpack.c.b16 %v402, %v401
    %v502 = vpack.c.b16 %v404, %v403
    %v503 = vpack.c.b16 %v406, %v405
    %v504 = vpack.c.b16 %v408, %v407
    %v505 = vpack.c.b16 %v410, %v409
    %v506 = vpack.c.b16 %v412, %v411
    %v507 = vpack.c.b16 %v414, %v413
    %v508 = vpack.c.b16 %v416, %v415
    %v509 = vpack.c.b16 %v418, %v417
    %v510 = vpack.c.b16 %v420, %v419
    %v511 = vpack.c.b16 %v422, %v421
    %v512 = vpack.c.b16 %v424, %v423
    %v513 = vpack.c.b16 %v426, %v425
    %v514 = vpack.c.b16 %v428, %v427
    %v515 = vpack.c.b16 %v430, %v429
    %v516 = vpack.c.b16 %v432, %v431
    %v517 = vpack.c.b16 %v434, %v433
    %v518 = vpack.c.b16 %v436, %v435
    %v519 = vpack.c.b16 %v438, %v437
    %v520 = vpack.c.b16 %v440, %v439
    %v521 = vpack.c.b16 %v442, %v441
    %v522 = vpack.c.b16 %v444, %v443
    %v523 = vpack.c.b16 %v446, %v445
    %v524 = vpack.c.b16 %v448, %v447
    %v525 = vpack.c.b16 %v450, %v449
    %v526 = vpack.c.b16 %v452, %v451
    %v527 = vpack.c.b16 %v454, %v453
    %v528 = vpack.c.b16 %v456, %v455
    %v529 = vpack.c.b16 %v458, %v457
    %v530 = vpack.c.b16 %v460, %v459
    %v531 = vpack.c.b16 %v462, %v461
    %v532 = vpack.c.b16 %v464, %v463
    %v533 = vpack.c.b16 %v466, %v465
    %v534 = vpack.c.b16 %v468, %v467
    %v535 = vpack.c.b16 %v470, %v469
    %v536 = vpack.c.b16 %v472, %v471
    %601 = vmatpush.bf16.msra.mxu0 %v480
    %602 = vmatpush.bf16.msra.mxu0 %v479
    %603 = vmatpush.bf16.msra.mxu0 %v478
    %604 = vmatpush.bf16.msra.mxu0 %v477
    %605 = vmatpush.bf16.msra.mxu0 %v476
    %606 = vmatpush.bf16.msra.mxu0 %v475
    %607 = vmatpush.bf16.msra.mxu0 %v474
    %608 = vmatpush.bf16.msra.mxu0 %v473
    %609 = vmatmul.bf16.gmra.mxu0 %v209
    %v610 = vpop.f32.mrf.mxu0
    %v611 = vadd.f32 0.0, %v610
    %v612 = vpop.f32.mrf.mxu0
    %613 = vdwg.mxu0
    %614 = vmatpush.bf16.msra.mxu0 %v488
    %615 = vmatpush.bf16.msra.mxu0 %v487
    %616 = vmatpush.bf16.msra.mxu0 %v486
    %617 = vmatpush.bf16.msra.mxu0 %v485
    %618 = vmatpush.bf16.msra.mxu0 %v484
    %619 = vmatpush.bf16.msra.mxu0 %v483
    %620 = vmatpush.bf16.msra.mxu0 %v482
    %621 = vmatpush.bf16.msra.mxu0 %v481
    %622 = vmatmul.bf16.gmra.mxu0 %v210
    %v623 = vpop.f32.mrf.mxu0
    %v624 = vadd.f32 %v611, %v623
    %v625 = vpop.f32.mrf.mxu0
    %626 = vdwg.mxu0
    %627 = vmatpush.bf16.msra.mxu0 %v496
    %628 = vmatpush.bf16.msra.mxu0 %v495
    %629 = vmatpush.bf16.msra.mxu0 %v494
    %630 = vmatpush.bf16.msra.mxu0 %v493
    %631 = vmatpush.bf16.msra.mxu0 %v492
    %632 = vmatpush.bf16.msra.mxu0 %v491
    %633 = vmatpush.bf16.msra.mxu0 %v490
    %634 = vmatpush.bf16.msra.mxu0 %v489
    %635 = vmatmul.bf16.gmra.mxu0 %v211
    %v636 = vpop.f32.mrf.mxu0
    %v637 = vadd.f32 %v624, %v636
    %v638 = vpop.f32.mrf.mxu0
    %639 = vdwg.mxu0
    %640 = vmatpush.bf16.msra.mxu0 %v504
    %641 = vmatpush.bf16.msra.mxu0 %v503
    %642 = vmatpush.bf16.msra.mxu0 %v502
    %643 = vmatpush.bf16.msra.mxu0 %v501
    %644 = vmatpush.bf16.msra.mxu0 %v500
    %645 = vmatpush.bf16.msra.mxu0 %v499
    %646 = vmatpush.bf16.msra.mxu0 %v498
    %647 = vmatpush.bf16.msra.mxu0 %v497
    %648 = vmatmul.bf16.gmra.mxu0 %v212
    %v649 = vpop.f32.mrf.mxu0
    %v650 = vadd.f32 %v637, %v649
    %v651 = vpop.f32.mrf.mxu0
    %652 = vdwg.mxu0
    %653 = vmatpush.bf16.msra.mxu0 %v512
    %654 = vmatpush.bf16.msra.mxu0 %v511
    %655 = vmatpush.bf16.msra.mxu0 %v510
    %656 = vmatpush.bf16.msra.mxu0 %v509
    %657 = vmatpush.bf16.msra.mxu0 %v508
    %658 = vmatpush.bf16.msra.mxu0 %v507
    %659 = vmatpush.bf16.msra.mxu0 %v506
    %660 = vmatpush.bf16.msra.mxu0 %v505
    %661 = vmatmul.bf16.gmra.mxu0 %v213
    %v662 = vpop.f32.mrf.mxu0
    %v663 = vadd.f32 %v650, %v662
    %v664 = vpop.f32.mrf.mxu0
    %665 = vdwg.mxu0
    %666 = vmatpush.bf16.msra.mxu0 %v520
    %667 = vmatpush.bf16.msra.mxu0 %v519
    %668 = vmatpush.bf16.msra.mxu0 %v518
    %669 = vmatpush.bf16.msra.mxu0 %v517
    %670 = vmatpush.bf16.msra.mxu0 %v516
    %671 = vmatpush.bf16.msra.mxu0 %v515
    %672 = vmatpush.bf16.msra.mxu0 %v514
    %673 = vmatpush.bf16.msra.mxu0 %v513
    %674 = vmatmul.bf16.gmra.mxu0 %v214
    %v675 = vpop.f32.mrf.mxu0
    %v676 = vadd.f32 %v663, %v675
    %v677 = vpop.f32.mrf.mxu0
    %678 = vdwg.mxu0
    %679 = vmatpush.bf16.msra.mxu0 %v528
    %680 = vmatpush.bf16.msra.mxu0 %v527
    %681 = vmatpush.bf16.msra.mxu0 %v526
    %682 = vmatpush.bf16.msra.mxu0 %v525
    %683 = vmatpush.bf16.msra.mxu0 %v524
    %684 = vmatpush.bf16.msra.mxu0 %v523
    %685 = vmatpush.bf16.msra.mxu0 %v522
    %686 = vmatpush.bf16.msra.mxu0 %v521
    %687 = vmatmul.bf16.gmra.mxu0 %v215
    %v688 = vpop.f32.mrf.mxu0
    %v689 = vadd.f32 %v676, %v688
    %v690 = vpop.f32.mrf.mxu0
    %691 = vdwg.mxu0
    %692 = vmatpush.bf16.msra.mxu0 %v536
    %693 = vmatpush.bf16.msra.mxu0 %v535
    %694 = vmatpush.bf16.msra.mxu0 %v534
    %695 = vmatpush.bf16.msra.mxu0 %v533
    %696 = vmatpush.bf16.msra.mxu0 %v532
    %697 = vmatpush.bf16.msra.mxu0 %v531
    %698 = vmatpush.bf16.msra.mxu0 %v530
    %699 = vmatpush.bf16.msra.mxu0 %v529
    %700 = vmatmul.bf16.gmra.mxu0 %v216
    %v701 = vpop.f32.mrf.mxu0
    %v702 = vadd.f32 %v689, %v701
    %v703 = vpop.f32.mrf.mxu0
    %704 = vdwg.mxu0
    %v705 = vadd.f32 %v185, %v702
    %706 = vst [vmem:[#allocation8] sm:$0x3] %v705
    // Predicated region
    $region34: #{tpu_custom_call.1} parent=1 // pred_check
      %p707 = pneg %p52
    $region35: #{tpu_custom_call.1} parent=1 // pred_check_branch
      %709 = sbr.rel (%p707) target = $region37
    $region36: #{tpu_custom_call.1} parent=1 // pred_region
      %v710 = vld [vmem:[#allocation8] sm:$0x3]
      %v711 = vld [vmem:[%s3] sm:$0x1]
      %v713 = vperm.slane %v711, 0
      %v715 = vadd.f32 %v710, %v713
      %s716 = sld [smem:[#allocation2]]
      %v717 = vld [vmem:[%s4] sm:$0x3]
      %v718 = vadd.f32 %v717, 1.0
      %v719 = vstv %s716
      %v720 = vmul.f32 %v719, %v718
      %v721 = vrcp.pop %v720
      %v722 = vmul.f32 %v720, %v721
      %v723 = vsub.f32 1.0, %v722
      %v724 = vmul.f32 %v721, %v723
      %v725 = vadd.f32 %v721, %v724
      %vm726 = vweird.f32 %v720
      %vm727 = vweird.f32 %v721
      %vm728 = vmor %vm726, %vm727
      %v729 = vsel %vm728, %v721, %v725
      %v730 = vand.u32 2147483647, %v720
      %vm731 = vcmp.eq.f32.partialorder %v730, 8.507059e+37
      %v732 = vand.u32 %v720, 2147483648
      %v733 = vor.u32 1.1754944e-38, %v732
      %v734 = vsel %vm731, %v733, %v729
      %v735 = vmul.f32 1.0, %v734
      %737 = vset.pattern.permute.xlu0 0
      %738 = vperm.xlu0 %737, %v735
      %v739 = vpop.permute.xlu0 %738
      %v741 = vmul.f32 %v715, %v739
      %742 = vst [vmem:[#allocation8] sm:$0x3] %v741
    $region37: #{tpu_custom_call.1} parent=1 // pred_fallthru
      _
    // Predicated region
    $region38: #{tpu_custom_call.1} parent=1 // pred_check
      _
    $region39: #{tpu_custom_call.1} parent=1 // pred_check_branch
      %744 = sbr.rel (0) target = $region41
    $region40: #{tpu_custom_call.1} parent=1 // pred_region
      %746 = vsyncadd [#allocation5], 0
      %s748 = sshll.u32 [#allocation8], 4
      %s749 = int_to_ptr.vmem [resolvable:$true] %s748
      %s750 = sshll.u32 %s5, 4
      %s751 = int_to_ptr.hbm [resolvable:$true] %s750
      %753 = dma.vmem_to_hbm [thread:$0]  %s749, 32, %s751, [#allocation5]
    $region41: #{tpu_custom_call.1} parent=1 // pred_fallthru
      _
    // Predicated region
    $region42: #{tpu_custom_call.1} parent=1 // pred_check
      _
    $region43: #{tpu_custom_call.1} parent=1 // pred_check_branch
      %755 = sbr.rel (0) target = $region45
    $region44: #{tpu_custom_call.1} parent=1 // pred_region
      %757 = dma.done [#allocation5], 32
    $region45: #{tpu_custom_call.1} parent=1 // pred_fallthru
      _
    %758 = vsyncpa [#allocation4], 1
    %759 = vsyncpa [#allocation7], 1
    %760 = vsyncpa [#allocation5], 1

</llo_original>
